<compile_context>
chip_gen: v6e
topology: v6e:2x2x1
jax: 0.10.0
libtpu: 0.0.40
codegen_flags: <defaults>
</compile_context>

<pallas_src>
import functools

import jax
import jax.numpy as jnp
from jax.experimental import pallas as pl
from jax.experimental.pallas import tpu as pltpu

_LANES = 128
_SUBLANES = 8
_CHUNK_ROWS = 512  # 512 x 128 x 4 B = 256 KiB of f32 temporaries per chunk.


def _round_up(x, m):
    return ((x + m - 1) // m) * m


def _pick_block(rows, itemsize, block_rows=None):
    """Choose (block_rows, chunk_rows): dtype/generation-aware tile height."""
    if block_rows is None:
        try:
            vmem_cap = int(pltpu.get_tpu_info().vmem_capacity_bytes)
        except Exception:  # interpret mode / older jax: use a safe default.
            vmem_cap = 64 << 20
        # 2 inputs x 2 pipeline buffers per tile: keep the input buffers at
        # roughly <= half of VMEM, hard-capped at 8 MiB per tile (enough to
        # amortize the ~0.35 us per-step overhead even at 3.2 TB/s HBM).
        tile_bytes = max(1 << 20, min(8 << 20, vmem_cap // 8))
        block_rows = tile_bytes // (_LANES * itemsize)
    br = min(int(block_rows), _round_up(rows, _SUBLANES))
    if br >= _CHUNK_ROWS:
        br -= br % _CHUNK_ROWS          # multiple of the chunk (and of 8)
        chunk = _CHUNK_ROWS
    else:
        br = _round_up(br, _SUBLANES)   # tiny inputs: single chunk
        chunk = br
    return br, chunk


def _l1l2_partial_kernel(out_ref, tgt_ref, part_ref, *,
                         block_rows, chunk_rows, tail_rows, num_blocks):
    """Per-block lane-wise partial sums of |d| and d^2.

    out_ref/tgt_ref: (block_rows, 128) input tiles (native dtype).
    part_ref:        (1, 2, 8, 128) f32 output block:
                     [0] lane-wise partial sum of |d|, [1] of d^2.
    """
    num_chunks = block_rows // chunk_rows
    groups = chunk_rows // _SUBLANES

    def chunk_sums(start, valid_rows):
        # Load one chunk, upcast on the VPU, difference, (optionally) mask
        # invalid rows BEFORE any reduction, then reduce sublane-groups with
        # tile-aligned reshapes (pure VPU adds, no XLU).
        o = out_ref[pl.ds(start, chunk_rows), :].astype(jnp.float32)
        t = tgt_ref[pl.ds(start, chunk_rows), :].astype(jnp.float32)
        d = o - t
        if valid_rows is not None:
            row = jax.lax.broadcasted_iota(jnp.int32, d.shape, 0) + start
            d = jnp.where(row < valid_rows, d, 0.0)
        ad = jnp.abs(d).reshape(groups, _SUBLANES, _LANES).sum(axis=0)
        sq = (d * d).reshape(groups, _SUBLANES, _LANES).sum(axis=0)
        return ad, sq

    def block_reduce(valid_rows):
        if num_chunks == 1:
            acc_abs, acc_sq = chunk_sums(0, valid_rows)
        else:
            def body(c, carry):
                a, s = carry
                start = pl.multiple_of(c * chunk_rows, chunk_rows)
                ad, sq = chunk_sums(start, valid_rows)
                return a + ad, s + sq

            zeros = jnp.zeros((_SUBLANES, _LANES), jnp.float32)
            acc_abs, acc_sq = jax.lax.fori_loop(
                0, num_chunks, body, (zeros, zeros))
        part_ref[0, 0, :, :] = acc_abs
        part_ref[0, 1, :, :] = acc_sq

    if tail_rows == block_rows:
        # rows % block_rows == 0: every block is full, emit a single
        # unmasked body (no iota, no second copy of the reduce loop).
        block_reduce(None)
    elif num_blocks == 1:
        block_reduce(tail_rows)
    else:
        pid = pl.program_id(0)
        last = num_blocks - 1

        @pl.when(pid < last)
        def _():
            block_reduce(None)

        @pl.when(pid == last)
        def _():
            block_reduce(tail_rows)


def l1l2_loss(output, target, alpha=1.0, beta=1.0, block_rows=None):
    assert output.shape == target.shape
    n = int(output.size)
    assert n > 0

    # Flatten in native dtype (pure reshape; the kernel upcasts on the VPU).
    o = jnp.ravel(output)
    t = jnp.ravel(target)

    rows = n // _LANES
    n_aligned = rows * _LANES

    sum_abs = jnp.float32(0.0)
    sum_sq = jnp.float32(0.0)

    if n_aligned < n:
        # Sub-128-element ragged tail: static slice + plain-JAX reduce (tiny);
        # avoids jnp.pad rewriting both full inputs in HBM.
        d_tail = (o[n_aligned:].astype(jnp.float32)
                  - t[n_aligned:].astype(jnp.float32))
        sum_abs = sum_abs + jnp.sum(jnp.abs(d_tail))
        sum_sq = sum_sq + jnp.sum(d_tail * d_tail)

    if rows > 0:
        o2d = o[:n_aligned].reshape(rows, _LANES)
        t2d = t[:n_aligned].reshape(rows, _LANES)

        itemsize = jnp.dtype(output.dtype).itemsize
        br, chunk = _pick_block(rows, itemsize, block_rows)
        num_blocks = int(pl.cdiv(rows, br))
        tail_rows = rows - (num_blocks - 1) * br
        tile_bytes = br * _LANES * itemsize
        # 2 inputs x 2 pipeline buffers + chunk temporaries + headroom;
        # >= the scoped default on every generation, well under physical VMEM.
        vmem_limit = int(min(48 << 20,
                             max(32 << 20, 4 * tile_bytes + (8 << 20))))

        kernel = functools.partial(
            _l1l2_partial_kernel,
            block_rows=br, chunk_rows=chunk,
            tail_rows=tail_rows, num_blocks=num_blocks)

        partials = pl.pallas_call(
            kernel,
            out_shape=jax.ShapeDtypeStruct(
                (num_blocks, 2, _SUBLANES, _LANES), jnp.float32),
            grid_spec=pltpu.PrefetchScalarGridSpec(
                num_scalar_prefetch=0,
                grid=(num_blocks,),
                in_specs=[
                    pl.BlockSpec((br, _LANES), lambda i: (i, 0)),
                    pl.BlockSpec((br, _LANES), lambda i: (i, 0)),
                ],
                out_specs=pl.BlockSpec(
                    (1, 2, _SUBLANES, _LANES), lambda i: (i, 0, 0, 0)),
            ),
            compiler_params=pltpu.CompilerParams(
                # Independent blocks -> megacore (v7x) can shard across TCs.
                dimension_semantics=("parallel",),
                vmem_limit_bytes=vmem_limit,
            ),
            cost_estimate=pl.CostEstimate(
                flops=6 * n,
                transcendentals=0,
                bytes_accessed=(2 * n * itemsize
                                + num_blocks * 2 * _SUBLANES * _LANES * 4),
            ),
        )(o2d, t2d)

        # Tiny final reduction (negligible vs streaming the inputs).
        sums = jnp.sum(partials, axis=(0, 2, 3))
        sum_abs = sum_abs + sums[0]
        sum_sq = sum_sq + sums[1]

    inv_n = jnp.float32(1.0 / float(n))
    return (jnp.float32(alpha) * sum_abs + jnp.float32(beta) * sum_sq) * inv_n


if __name__ == "__main__":
    key = jax.random.PRNGKey(0)
    k1, k2, k3, k4 = jax.random.split(key, 4)

    def reference(out, tgt, alpha, beta):
        d = out.astype(jnp.float32) - tgt.astype(jnp.float32)
        return alpha * jnp.mean(jnp.abs(d)) + beta * jnp.mean(d * d)

    # Lane-aligned NCHW-like shape (numel % 128 == 0): the common fast path.
    shape = (2, 4, 16, 16)
    out1 = jax.random.normal(k1, shape, dtype=jnp.float32)
    tgt1 = jax.random.normal(k2, shape, dtype=jnp.float32)
    loss1 = l1l2_loss(out1, tgt1, alpha=1.0, beta=1.0)
    jax.block_until_ready(loss1)
    ref1 = reference(out1, tgt1, 1.0, 1.0)
    assert jnp.allclose(loss1, ref1, rtol=1e-5, atol=1e-5), (loss1, ref1)

    # Ragged shape (numel % 128 != 0): exercises wrapper tail + row mask.
    shape2 = (3, 5, 7, 11)
    out2 = jax.random.normal(k3, shape2, dtype=jnp.float32)
    tgt2 = jax.random.normal(k4, shape2, dtype=jnp.float32)
    loss2 = l1l2_loss(out2, tgt2, alpha=0.7, beta=1.3)
    jax.block_until_ready(loss2)
    ref2 = reference(out2, tgt2, 0.7, 1.3)
    assert jnp.allclose(loss2, ref2, rtol=1e-5, atol=1e-5), (loss2, ref2)

    print("KERNEL_OK")
</pallas_src>

<mosaic_0001>
module attributes {stable_mosaic.version = 11 : i64} {
  func.func @_l1l2_partial_kernel(%arg0: i32, %arg1: memref<16x128xf32, #tpu.memory_space<vmem>>, %arg2: memref<16x128xf32, #tpu.memory_space<vmem>>, %arg3: memref<1x2x8x128xf32, #tpu.memory_space<vmem>>) attributes {dimension_semantics = [#tpu.dimension_semantics<parallel>], iteration_bounds = array<i64: 1>, scalar_prefetch = 0 : i64, scratch_operands = 0 : i64, tpu.core_type = #tpu.core_type<tc>, window_params = [{transform_indices = @transform_0, window_bounds = array<i64: 16, 128>}, {transform_indices = @transform_1, window_bounds = array<i64: 16, 128>}, {transform_indices = @transform_2, window_bounds = array<i64: 1, 2, 8, 128>}]} {
    %c0 = arith.constant 0 : index
    %c0_0 = arith.constant 0 : index
    %0 = vector.load %arg1[%c0, %c0_0] : memref<16x128xf32, #tpu.memory_space<vmem>>, vector<16x128xf32>
    %c0_1 = arith.constant 0 : index
    %c0_2 = arith.constant 0 : index
    %1 = vector.load %arg2[%c0_1, %c0_2] : memref<16x128xf32, #tpu.memory_space<vmem>>, vector<16x128xf32>
    %2 = arith.subf %0, %1 : vector<16x128xf32>
    %3 = math.absf %2 : vector<16x128xf32>
    %4 = vector.shape_cast %3 : vector<16x128xf32> to vector<2x8x128xf32>
    %cst = arith.constant dense<0.000000e+00> : vector<8x128xf32>
    %5 = vector.multi_reduction <add>, %4, %cst [0] : vector<2x8x128xf32> to vector<8x128xf32>
    %6 = arith.mulf %2, %2 : vector<16x128xf32>
    %7 = vector.shape_cast %6 : vector<16x128xf32> to vector<2x8x128xf32>
    %cst_3 = arith.constant dense<0.000000e+00> : vector<8x128xf32>
    %8 = vector.multi_reduction <add>, %7, %cst_3 [0] : vector<2x8x128xf32> to vector<8x128xf32>
    %c0_4 = arith.constant 0 : index
    %c0_5 = arith.constant 0 : index
    %c0_6 = arith.constant 0 : index
    %c0_7 = arith.constant 0 : index
    %9 = vector.load %arg3[%c0_4, %c0_5, %c0_6, %c0_7] : memref<1x2x8x128xf32, #tpu.memory_space<vmem>>, vector<1x1x8x128xf32>
    %10 = vector.shape_cast %9 : vector<1x1x8x128xf32> to vector<8x128xf32>
    %11 = vector.shape_cast %5 : vector<8x128xf32> to vector<1x1x8x128xf32>
    tpu.vector_store %arg3[%c0_4, %c0_5, %c0_6, %c0_7], %11 {strides = array<i32>} : memref<1x2x8x128xf32, #tpu.memory_space<vmem>>, vector<1x1x8x128xf32>,
    %c0_8 = arith.constant 0 : index
    %c1 = arith.constant 1 : index
    %c0_9 = arith.constant 0 : index
    %c0_10 = arith.constant 0 : index
    %12 = vector.load %arg3[%c0_8, %c1, %c0_9, %c0_10] : memref<1x2x8x128xf32, #tpu.memory_space<vmem>>, vector<1x1x8x128xf32>
    %13 = vector.shape_cast %12 : vector<1x1x8x128xf32> to vector<8x128xf32>
    %14 = vector.shape_cast %8 : vector<8x128xf32> to vector<1x1x8x128xf32>
    tpu.vector_store %arg3[%c0_8, %c1, %c0_9, %c0_10], %14 {strides = array<i32>} : memref<1x2x8x128xf32, #tpu.memory_space<vmem>>, vector<1x1x8x128xf32>,
    return
  }
  func.func @transform_0(%arg0: i32) -> (i32, i32) {
    %c0_i32 = arith.constant 0 : i32
    %c0_i32_0 = arith.constant 0 : i32
    return %arg0, %c0_i32 : i32, i32
  }
  func.func @transform_1(%arg0: i32) -> (i32, i32) {
    %c0_i32 = arith.constant 0 : i32
    %c0_i32_0 = arith.constant 0 : i32
    return %arg0, %c0_i32 : i32, i32
  }
  func.func @transform_2(%arg0: i32) -> (i32, i32, i32, i32) {
    %c0_i32 = arith.constant 0 : i32
    %c0_i32_0 = arith.constant 0 : i32
    %c0_i32_1 = arith.constant 0 : i32
    %c0_i32_2 = arith.constant 0 : i32
    return %arg0, %c0_i32, %c0_i32_0, %c0_i32_1 : i32, i32, i32, i32
  }
}

</mosaic_0001>

<llo_original>
// kernel: tpu_custom_call.1
$region0: #{tpu_custom_call.1}
  #allocation0 [shape = 'u32[]', space=smem, size = 0x4, offset = 0x4, fixed_abs, tag = 'smem constant byte address 0x4 - core index']
  #allocation1 [shape = 'u32[144,128]{1,0:T(1,128)}', space=vmem, size = 0x12000, scoped, tag = 'internal scratch']
  %s0 = inlined_call_operand.hbm [shape: f32[16,128], index: 0, kind: input, shape index: {}]
  %s1 = inlined_call_operand.hbm [shape: f32[16,128], index: 1, kind: input, shape index: {}]
  %s2 = inlined_call_operand.hbm [shape: f32[1,2,8,128], index: 2, kind: output, shape index: {}]
  %s3 = sld [smem:[#allocation0]]
  $region26: #{tpu_custom_call.1} parent=0
    _
  %s5 = ssub.s32 1, %s3
  %s6 = scalar_select 0, %s5, %s3
  $region1: #{tpu_custom_call.1} parent=0
    #allocation2 [shape = 'u8[8192]{0}', space=vmem, size = 0x2000, scoped, tag = 'input window, operand 0, single buffered']
    #allocation3 [shape = 's32[1]{0}', space=sflag, size = 0x4, scoped, tag = 'scoped memory for tpu_custom_call.1']
    #allocation4 [shape = 's32[1]{0}', space=sflag, size = 0x4, scoped, tag = 'scoped memory for tpu_custom_call.1']
    #allocation5 [shape = 'u8[8192]{0}', space=vmem, size = 0x2000, scoped, tag = 'input window, operand 1, single buffered']
    #allocation6 [shape = 's32[1]{0}', space=sflag, size = 0x4, scoped, tag = 'scoped memory for tpu_custom_call.1']
    #allocation7 [shape = 'u8[8192]{0}', space=vmem, size = 0x2000, scoped, tag = 'output window, operand 0, single buffered']
    %7 = vsyncpa [#allocation3], 0
    %8 = vsyncpa [#allocation6], 0
    %9 = vsyncpa [#allocation4], 0
    // Predicated region
    $region2: #{tpu_custom_call.1} parent=1 // pred_check
      _
    $region3: #{tpu_custom_call.1} parent=1 // pred_check_branch
      %11 = sbr.rel (0) target = $region5
    $region4: #{tpu_custom_call.1} parent=1 // pred_region
      %s13 = ssub.s32 256, 256
      %14 = vsyncadd [#allocation3], %s13
      %s15 = sshll.u32 [#allocation2], 4
      %s16 = int_to_ptr.vmem [resolvable:$true] %s15
      %21 = dma.hbm_to_vmem [thread:$0]  %s0, 256, %s16, [#allocation3], 128, 128, 8
    $region5: #{tpu_custom_call.1} parent=1 // pred_fallthru
      _
    // Predicated region
    $region6: #{tpu_custom_call.1} parent=1 // pred_check
      _
    $region7: #{tpu_custom_call.1} parent=1 // pred_check_branch
      %23 = sbr.rel (0) target = $region9
    $region8: #{tpu_custom_call.1} parent=1 // pred_region
      %s25 = ssub.s32 256, 256
      %26 = vsyncadd [#allocation6], %s25
      %s27 = sshll.u32 [#allocation5], 4
      %s28 = int_to_ptr.vmem [resolvable:$true] %s27
      %33 = dma.hbm_to_vmem [thread:$0]  %s1, 256, %s28, [#allocation6], 128, 128, 8
    $region9: #{tpu_custom_call.1} parent=1 // pred_fallthru
      _
    // Predicated region
    $region10: #{tpu_custom_call.1} parent=1 // pred_check
      _
    $region11: #{tpu_custom_call.1} parent=1 // pred_check_branch
      %35 = sbr.rel (0) target = $region13
    $region12: #{tpu_custom_call.1} parent=1 // pred_region
      %36 = dma.done [#allocation3], 256
    $region13: #{tpu_custom_call.1} parent=1 // pred_fallthru
      _
    // Predicated region
    $region14: #{tpu_custom_call.1} parent=1 // pred_check
      _
    $region15: #{tpu_custom_call.1} parent=1 // pred_check_branch
      %38 = sbr.rel (0) target = $region17
    $region16: #{tpu_custom_call.1} parent=1 // pred_region
      %39 = dma.done [#allocation6], 256
    $region17: #{tpu_custom_call.1} parent=1 // pred_fallthru
      _
    %v40 = vld [vmem:[#allocation2] sm:$0xff]
    %v41 = vld [vmem:[#allocation2 + $0x8] sm:$0xff]
    %v42 = vld [vmem:[#allocation5] sm:$0xff]
    %v43 = vld [vmem:[#allocation5 + $0x8] sm:$0xff]
    %v44 = vsub.f32 %v40, %v42
    %v45 = vsub.f32 %v41, %v43
    %v46 = vand.u32 2147483647, %v44
    %v47 = vand.u32 2147483647, %v45
    %v48 = vadd.f32 %v46, %v47
    %v49 = vmul.f32 %v44, %v44
    %v50 = vmul.f32 %v45, %v45
    %v51 = vadd.f32 %v49, %v50
    %52 = vst [vmem:[#allocation7] sm:$0xff] %v48
    %s53 = scalar_lea.vmem [#allocation7], 8
    %54 = vst [vmem:[%s53] sm:$0xff] %v51
    // Predicated region
    $region18: #{tpu_custom_call.1} parent=1 // pred_check
      _
    $region19: #{tpu_custom_call.1} parent=1 // pred_check_branch
      %56 = sbr.rel (0) target = $region21
    $region20: #{tpu_custom_call.1} parent=1 // pred_region
      %s58 = ssub.s32 256, 256
      %59 = vsyncadd [#allocation4], %s58
      %s60 = sshll.u32 [#allocation7], 4
      %s61 = int_to_ptr.vmem [resolvable:$true] %s60
      %66 = dma.vmem_to_hbm [thread:$0]  %s61, 256, %s2, [#allocation4], 128, 128, 8
    $region21: #{tpu_custom_call.1} parent=1 // pred_fallthru
      _
    // Predicated region
    $region22: #{tpu_custom_call.1} parent=1 // pred_check
      _
    $region23: #{tpu_custom_call.1} parent=1 // pred_check_branch
      %68 = sbr.rel (0) target = $region25
    $region24: #{tpu_custom_call.1} parent=1 // pred_region
      %69 = dma.done [#allocation4], 256
    $region25: #{tpu_custom_call.1} parent=1 // pred_fallthru
      _
    %70 = vsyncpa [#allocation3], 1
    %71 = vsyncpa [#allocation6], 1
    %72 = vsyncpa [#allocation4], 1

</llo_original>
